<compile_context>
chip_gen: v6e
topology: v6e:2x2x1
jax: 0.10.0
libtpu: 0.0.40
codegen_flags: <defaults>
</compile_context>

<pallas_src>
import math

import jax
import jax.numpy as jnp
from jax.experimental import pallas as pl
from jax.experimental.pallas import tpu as pltpu


def _round_up(x, m):
    return ((x + m - 1) // m) * m


def _device_kind():
    try:
        return jax.devices()[0].device_kind.lower()
    except Exception:
        return ""


def _tensorcores_per_device():
    # v7x exposes two TensorCores per device; v5e/v6e are single-TC.  Other
    # generations default to 1 here: the forced grid split is a perf-only
    # choice, never a correctness one.
    return 2 if "v7" in _device_kind() else 1


def _compute_dtype(x_dtype):
    # v7x: bf16 VPU/EUP plus 3.2 TB/s HBM -> the f32 upcast chain is no longer
    # comfortably hidden under DMA, so compute bf16 natively and halve vreg
    # pressure.  v5e (f32-only VPU/EUP) and v6e keep the exact f32 upcast.
    if jnp.dtype(x_dtype) == jnp.dtype(jnp.bfloat16) and "v7" in _device_kind():
        return jnp.bfloat16
    return jnp.float32


def _sigmoid_via_tanh(x):
    # sigmoid(x) == 0.5 * tanh(0.5 * x) + 0.5 : one EUP transcendental, no
    # divide.  Keeps total EUP work at 2 transcendentals per output element.
    return 0.5 * jnp.tanh(0.5 * x) + 0.5


def _make_fused_kernel(compute_dtype):
    """x_ref: (rt, 2C) fused contiguous block; o_ref: (rt, C)."""

    def kernel(x_ref, o_ref):
        c = o_ref.shape[-1]
        x = x_ref[...].astype(compute_dtype)
        # When C % 128 == 0 this split is pure vreg selection (no XLU, no
        # copy); otherwise the relayout cost is hidden under DMA for this
        # memory-bound op.
        y = jnp.tanh(x[:, :c]) * _sigmoid_via_tanh(x[:, c:])
        o_ref[...] = y.astype(o_ref.dtype)

    return kernel


def _make_split_kernel(compute_dtype):
    """a_ref/b_ref: (rt, ct) channel tiles of the tanh / sigmoid halves."""

    def kernel(a_ref, b_ref, o_ref):
        a = a_ref[...].astype(compute_dtype)
        b = b_ref[...].astype(compute_dtype)
        o_ref[...] = (jnp.tanh(a) * _sigmoid_via_tanh(b)).astype(o_ref.dtype)

    return kernel


def gated_tanh_pallas(x, dim=-1, *, block_input_bytes=4 * 1024 * 1024):
    """Gated tanh: tanh(x[..., :C]) * sigmoid(x[..., C:]) along `dim`.

    The kernel operates channels-last: leading axes are flattened into "rows"
    tiled along the sublane axis; the gated channel axis lives in lanes.
    For dim != -1 the array is moved to channels-last with plain-JAX glue.
    """
    ndim = x.ndim
    dim = dim % ndim
    moved = dim != ndim - 1
    if moved:
        # TODO(synk): dim != -1 pays for an extra HBM read+write (XLA
        # transpose round-trip); only the channels-last path is
        # bandwidth-optimal.
        x = jnp.moveaxis(x, dim, -1)

    *lead, two_c = x.shape
    if two_c % 2 != 0:
        raise ValueError("gated dimension must have even size")
    c = two_c // 2
    rows = math.prod(lead) if lead else 1
    x2d = x.reshape(rows, two_c)

    itemsize = jnp.dtype(x.dtype).itemsize
    # Sublane packing multiple: 8 f32 / 16 bf16 / 32 int8-fp8.
    sublane = max(8, 32 // itemsize)
    compute_dtype = _compute_dtype(x.dtype)
    num_tc = _tensorcores_per_device()

    # Per-step input budget.  Roughly 3x this lives in VMEM with double
    # buffering; clamp to 8 MiB so the footprint stays well under v7x's
    # 64 MiB VMEM per TensorCore while staying at/above the ~1-4 MiB tiles
    # measured to reach ~85% of HBM roofline for streaming kernels.
    block_input_bytes = max(64 * 1024, min(block_input_bytes, 8 * 1024 * 1024))

    lane_aligned = (c % 128 == 0)
    needs_chan_tiling = lane_aligned and (
        2 * c * itemsize * sublane > block_input_bytes
    )

    if needs_chan_tiling:
        # Very wide gated dim: add a second grid axis over 128-aligned channel
        # tiles so one block never exceeds the budget / scoped VMEM.  Each
        # half tile is ct*itemsize contiguous per row (multi-KiB here), so the
        # two-view DMA is still long-burst.
        rt = sublane
        ct = block_input_bytes // (2 * rt * itemsize)
        ct = max(128, (ct // 128) * 128)
        while c % ct != 0:  # ct must divide C exactly for integer block indices
            ct -= 128
        n_cblocks = c // ct
        grid = (pl.cdiv(rows, rt), n_cblocks)
        kernel = _make_split_kernel(compute_dtype)
        in_specs = [
            pl.BlockSpec((rt, ct), lambda i, j: (i, j)),              # tanh half
            pl.BlockSpec((rt, ct), lambda i, j: (i, j + n_cblocks)),  # sigmoid half
        ]
        operands = (x2d, x2d)
        out_specs = pl.BlockSpec((rt, ct), lambda i, j: (i, j))
        semantics = ("parallel", "parallel")
        in_block_bytes = 2 * rt * ct * itemsize
    else:
        # Fused (rt, 2C) block: one fully contiguous HBM read per step.  Both
        # block dims are legal regardless of C (last dim equals the full array
        # dim; rt is a sublane multiple).
        # TODO(synk): for C % 128 != 0 the output stores are masked (vst.msk);
        # presenting a lane-dense reshaped output slab is the next lever once
        # Mosaic reshape support for (rt, C)->(rt*C/128, 128) is guaranteed.
        # TODO(synk): a huge C that is NOT a multiple of 128 is not
        # channel-tiled and may exceed the VMEM limit.
        rt = block_input_bytes // max(1, 2 * c * itemsize)
        rt = max(sublane, (rt // sublane) * sublane)
        rt = min(rt, _round_up(rows, sublane))
        if num_tc >= 2 and rows > sublane:
            # Two TensorCores (v7x): give the "parallel" axis enough steps to
            # shard across both cores and still double-buffer on each.
            target_steps = 2 * num_tc
            if pl.cdiv(rows, rt) < target_steps:
                rt = max(sublane, _round_up(pl.cdiv(rows, target_steps), sublane))
        grid = (pl.cdiv(rows, rt),)  # ragged last block is masked by Pallas
        kernel = _make_fused_kernel(compute_dtype)
        in_specs = [pl.BlockSpec((rt, two_c), lambda i: (i, 0))]
        operands = (x2d,)
        out_specs = pl.BlockSpec((rt, c), lambda i: (i, 0))
        semantics = ("parallel",)
        in_block_bytes = rt * two_c * itemsize

    # Double-buffered pipeline footprint: 2 x (input block + output block),
    # with 2x slack for Mosaic-internal scratch.  Stays <= 48 MiB even at the
    # 8 MiB block cap, i.e. inside v7x's 64 MiB physical VMEM per core (and
    # raises v5e's 16 MiB scoped default when bigger blocks are requested).
    footprint = 2 * (in_block_bytes + in_block_bytes // 2)
    vmem_limit_bytes = int(min(max(2 * footprint, 32 * 1024 * 1024),
                               64 * 1024 * 1024))

    out2d = pl.pallas_call(
        kernel,
        out_shape=jax.ShapeDtypeStruct((rows, c), x.dtype),
        grid_spec=pltpu.PrefetchScalarGridSpec(
            num_scalar_prefetch=0,
            grid=grid,
            in_specs=in_specs,
            out_specs=out_specs,
        ),
        compiler_params=pltpu.CompilerParams(
            # "parallel" shards grid axes across TensorCores on multi-TC
            # chips.  TODO(synk): evaluate pltpu.CORE_PARALLEL on v7x once its
            # grid-divisibility constraints are verified.
            dimension_semantics=semantics,
            vmem_limit_bytes=vmem_limit_bytes,
        ),
    )(*operands)

    out = out2d.reshape(*lead, c)
    if moved:
        out = jnp.moveaxis(out, -1, dim)
    return out


def gated_tanh_ref(x, dim=-1):
    x_tanh, x_sig = jnp.split(x, 2, axis=dim)
    return jnp.tanh(x_tanh) * jax.nn.sigmoid(x_sig)


if __name__ == "__main__":
    key = jax.random.PRNGKey(0)
    k1, k2, k3, k4, k5 = jax.random.split(key, 5)

    # 1) Narrow unaligned channels (C=32): fused block, in-kernel slice.
    x1 = jax.random.normal(k1, (2, 8, 64), dtype=jnp.float32)
    y1 = jax.block_until_ready(gated_tanh_pallas(x1))
    assert y1.shape == (2, 8, 32)
    assert jnp.allclose(y1, gated_tanh_ref(x1), atol=1e-5, rtol=1e-5)

    # 2) Lane-aligned channels (C=128): fused contiguous read, free in-kernel
    #    split, unmasked lane-dense stores.
    x2 = jax.random.normal(k2, (2, 8, 256), dtype=jnp.float32)
    y2 = jax.block_until_ready(gated_tanh_pallas(x2))
    assert y2.shape == (2, 8, 128)
    assert jnp.allclose(y2, gated_tanh_ref(x2), atol=1e-5, rtol=1e-5)

    # 3) Row count not divisible by the tile -> ragged (masked) last block.
    x3 = jax.random.normal(k3, (3, 8, 64), dtype=jnp.float32)
    y3 = jax.block_until_ready(gated_tanh_pallas(x3))
    assert y3.shape == (3, 8, 32)
    assert jnp.allclose(y3, gated_tanh_ref(x3), atol=1e-5, rtol=1e-5)

    # 4) bf16 input (f32 compute on v5e/v6e, native bf16 compute on v7x).
    x4 = jax.random.normal(k4, (2, 8, 256), dtype=jnp.float32).astype(jnp.bfloat16)
    y4 = jax.block_until_ready(gated_tanh_pallas(x4))
    ref4 = gated_tanh_ref(x4.astype(jnp.float32)).astype(jnp.bfloat16)
    assert y4.shape == (2, 8, 128)
    assert jnp.allclose(y4.astype(jnp.float32), ref4.astype(jnp.float32),
                        atol=2e-2, rtol=2e-2)

    # 5) Non-last gated dim handled by the plain-JAX moveaxis glue.
    x5 = jnp.moveaxis(x1, -1, 1)  # (2, 64, 8)
    y5 = jax.block_until_ready(gated_tanh_pallas(x5, dim=1))
    assert y5.shape == (2, 32, 8)
    assert jnp.allclose(y5, jnp.moveaxis(y1, -1, 1), atol=1e-5, rtol=1e-5)

    # 6) Wide lane-aligned channels with a small budget: exercises the
    #    channel-tiled 2-D grid path (two lane-aligned half views).
    x6 = jax.random.normal(k5, (16, 4096), dtype=jnp.float32)
    y6 = jax.block_until_ready(
        gated_tanh_pallas(x6, block_input_bytes=64 * 1024))
    assert y6.shape == (16, 2048)
    assert jnp.allclose(y6, gated_tanh_ref(x6), atol=1e-5, rtol=1e-5)

    print("KERNEL_OK")
</pallas_src>

<mosaic_0001>
module attributes {stable_mosaic.version = 11 : i64} {
  func.func @kernel(%arg0: i32, %arg1: memref<16x64xf32, #tpu.memory_space<vmem>>, %arg2: memref<16x32xf32, #tpu.memory_space<vmem>>) attributes {dimension_semantics = [#tpu.dimension_semantics<parallel>], iteration_bounds = array<i64: 1>, scalar_prefetch = 0 : i64, scratch_operands = 0 : i64, tpu.core_type = #tpu.core_type<tc>, window_params = [{transform_indices = @transform_0, window_bounds = array<i64: 16, 64>}, {transform_indices = @transform_1, window_bounds = array<i64: 16, 32>}]} {
    %c0 = arith.constant 0 : index
    %c0_0 = arith.constant 0 : index
    %0 = vector.load %arg1[%c0, %c0_0] : memref<16x64xf32, #tpu.memory_space<vmem>>, vector<16x64xf32>
    %1 = vector.extract_strided_slice %0 {offsets = [0, 0], sizes = [16, 32], strides = [1, 1]} : vector<16x64xf32> to vector<16x32xf32>
    %2 = math.tanh %1 : vector<16x32xf32>
    %3 = vector.extract_strided_slice %0 {offsets = [0, 32], sizes = [16, 32], strides = [1, 1]} : vector<16x64xf32> to vector<16x32xf32>
    %cst = arith.constant 5.000000e-01 : f32
    %4 = vector.broadcast %cst : f32 to vector<16x32xf32>
    %5 = arith.mulf %4, %3 : vector<16x32xf32>
    %6 = math.tanh %5 : vector<16x32xf32>
    %cst_1 = arith.constant 5.000000e-01 : f32
    %7 = vector.broadcast %cst_1 : f32 to vector<16x32xf32>
    %8 = arith.mulf %7, %6 : vector<16x32xf32>
    %cst_2 = arith.constant 5.000000e-01 : f32
    %9 = vector.broadcast %cst_2 : f32 to vector<16x32xf32>
    %10 = arith.addf %8, %9 : vector<16x32xf32>
    %11 = arith.mulf %2, %10 : vector<16x32xf32>
    %c0_3 = arith.constant 0 : index
    %c0_4 = arith.constant 0 : index
    %12 = vector.load %arg2[%c0_3, %c0_4] : memref<16x32xf32, #tpu.memory_space<vmem>>, vector<16x32xf32>
    tpu.vector_store %arg2[%c0_3, %c0_4], %11 {strides = array<i32>} : memref<16x32xf32, #tpu.memory_space<vmem>>, vector<16x32xf32>,
    return
  }
  func.func @transform_0(%arg0: i32) -> (i32, i32) {
    %c0_i32 = arith.constant 0 : i32
    %c0_i32_0 = arith.constant 0 : i32
    return %arg0, %c0_i32 : i32, i32
  }
  func.func @transform_1(%arg0: i32) -> (i32, i32) {
    %c0_i32 = arith.constant 0 : i32
    %c0_i32_0 = arith.constant 0 : i32
    return %arg0, %c0_i32 : i32, i32
  }
}

</mosaic_0001>

<llo_original>
// kernel: tpu_custom_call.1
$region0: #{tpu_custom_call.1}
  #allocation0 [shape = 'u32[]', space=smem, size = 0x4, offset = 0x4, fixed_abs, tag = 'smem constant byte address 0x4 - core index']
  #allocation1 [shape = 'u32[144,128]{1,0:T(1,128)}', space=vmem, size = 0x12000, scoped, tag = 'internal scratch']
  %s0 = inlined_call_operand.hbm [shape: f32[16,64], index: 0, kind: input, shape index: {}]
  %s1 = inlined_call_operand.hbm [shape: f32[16,32], index: 1, kind: output, shape index: {}]
  %s2 = sld [smem:[#allocation0]]
  $region18: #{tpu_custom_call.1} parent=0
    _
  %s4 = ssub.s32 1, %s2
  %s5 = scalar_select 0, %s4, %s2
  $region1: #{tpu_custom_call.1} parent=0
    #allocation2 [shape = 'u8[8192]{0}', space=vmem, size = 0x2000, scoped, tag = 'input window, operand 0, single buffered']
    #allocation3 [shape = 's32[1]{0}', space=sflag, size = 0x4, scoped, tag = 'scoped memory for tpu_custom_call.1']
    #allocation4 [shape = 's32[1]{0}', space=sflag, size = 0x4, scoped, tag = 'scoped memory for tpu_custom_call.1']
    #allocation5 [shape = 'u8[8192]{0}', space=vmem, size = 0x2000, scoped, tag = 'output window, operand 0, single buffered']
    %6 = vsyncpa [#allocation3], 0
    %7 = vsyncpa [#allocation4], 0
    // Predicated region
    $region2: #{tpu_custom_call.1} parent=1 // pred_check
      _
    $region3: #{tpu_custom_call.1} parent=1 // pred_check_branch
      %9 = sbr.rel (0) target = $region5
    $region4: #{tpu_custom_call.1} parent=1 // pred_region
      %s11 = ssub.s32 256, 256
      %12 = vsyncadd [#allocation3], %s11
      %s13 = sshll.u32 [#allocation2], 4
      %s14 = int_to_ptr.vmem [resolvable:$true] %s13
      %19 = dma.hbm_to_vmem [thread:$0]  %s0, 256, %s14, [#allocation3], 128, 128, 8
    $region5: #{tpu_custom_call.1} parent=1 // pred_fallthru
      _
    // Predicated region
    $region6: #{tpu_custom_call.1} parent=1 // pred_check
      _
    $region7: #{tpu_custom_call.1} parent=1 // pred_check_branch
      %21 = sbr.rel (0) target = $region9
    $region8: #{tpu_custom_call.1} parent=1 // pred_region
      %22 = dma.done [#allocation3], 256
    $region9: #{tpu_custom_call.1} parent=1 // pred_fallthru
      _
    %v23 = vld [vmem:[#allocation2] sm:$0xff]
    %v24 = vld [vmem:[#allocation2 + $0x8] sm:$0xff]
    %v25 = vtanh.pop %v23
    %v26 = vtanh.pop %v24
    %v27 = vmul.f32 %v23, 0.5
    %v28 = vmul.f32 %v24, 0.5
    %v29 = vtanh.pop %v27
    %v30 = vtanh.pop %v28
    %v31 = vmul.f32 %v29, 0.5
    %v32 = vmul.f32 %v30, 0.5
    %v33 = vadd.f32 %v31, 0.5
    %v34 = vadd.f32 %v32, 0.5
    %37 = vrot.lane.b32.xlu0 %v33, 96
    %v38 = vpop.permute.xlu0 %37
    %39 = vrot.lane.b32.xlu0 %v34, 96
    %v40 = vpop.permute.xlu0 %39
    %v43 = vmul.f32 %v25, %v38
    %v44 = vmul.f32 %v26, %v40
    %vm45 = vcmask 261120
    %46 = vst.msk [vmem:[#allocation5] sm:$0xff] %vm45, %v43
    %47 = vst.msk [vmem:[#allocation5 + $0x8] sm:$0xff] %vm45, %v44
    // Predicated region
    $region10: #{tpu_custom_call.1} parent=1 // pred_check
      _
    $region11: #{tpu_custom_call.1} parent=1 // pred_check_branch
      %49 = sbr.rel (0) target = $region13
    $region12: #{tpu_custom_call.1} parent=1 // pred_region
      %s51 = ssub.s32 256, 256
      %52 = vsyncadd [#allocation4], %s51
      %s53 = sshll.u32 [#allocation5], 4
      %s54 = int_to_ptr.vmem [resolvable:$true] %s53
      %59 = dma.vmem_to_hbm [thread:$0]  %s54, 256, %s1, [#allocation4], 128, 128, 8
    $region13: #{tpu_custom_call.1} parent=1 // pred_fallthru
      _
    // Predicated region
    $region14: #{tpu_custom_call.1} parent=1 // pred_check
      _
    $region15: #{tpu_custom_call.1} parent=1 // pred_check_branch
      %61 = sbr.rel (0) target = $region17
    $region16: #{tpu_custom_call.1} parent=1 // pred_region
      %62 = dma.done [#allocation4], 256
    $region17: #{tpu_custom_call.1} parent=1 // pred_fallthru
      _
    %63 = vsyncpa [#allocation3], 1
    %64 = vsyncpa [#allocation4], 1

</llo_original>
